<compile_context>
chip_gen: v5e
topology: v5e:2x2
jax: 0.10.0
libtpu: 0.0.40
codegen_flags: <defaults>
</compile_context>

<pallas_src>
import functools

import jax
import jax.numpy as jnp
from jax.experimental import pallas as pl
from jax.experimental.pallas import tpu as pltpu

# Layer widths of the autoencoder MLP.
DIMS = [28 * 28, 128, 64, 12, 3, 12, 64, 128, 28 * 28]
N_LAYERS = len(DIMS) - 1  # 8 linear layers


def _ae_kernel(x_ref, *refs):
    """refs = (w1, b1, w2, b2, ..., w8, b8, o_ref).

    x_ref:     (TB, 784) f32  (cast to bf16 in-kernel for the MXU)
    weights:   (in, out) bf16
    biases:    (1, out)  f32
    o_ref:     (TB, 784) f32 (or bf16 if out_dtype=bfloat16)
    """
    o_ref = refs[-1]
    param_refs = refs[:-1]

    h = x_ref[...]  # f32
    for layer in range(N_LAYERS):
        w = param_refs[2 * layer][...]       # (in, out) bf16
        b = param_refs[2 * layer + 1][...]   # (1, out)  f32
        # bf16 x bf16 matmul on the MXU with f32 accumulation.  The
        # h->bf16 cast (including the very first one of the f32 input tile)
        # is free VPU work in this HBM-bound kernel.
        h = jnp.dot(h.astype(jnp.bfloat16), w,
                    preferred_element_type=jnp.float32) + b
        if layer < N_LAYERS - 1 and layer != 3:
            # ReLU after every hidden layer except the encoder bottleneck
            # output (layer index 3, Linear(12->3) has no activation).
            h = jnp.maximum(h, 0.0)
    # Final layer: Tanh (f32, EUP), then cast to the output dtype on store.
    o_ref[...] = jnp.tanh(h).astype(o_ref.dtype)


def _round_up(x, m):
    return ((x + m - 1) // m) * m


def prepare_params(params):
    """Cast params to their kernel dtypes ONCE, outside the jitted call.

    Returns a flat list [w1(bf16), b1(f32), ..., w8(bf16), b8(f32)] with
    biases reshaped to (1, d_out).
    """
    prepped = []
    for layer in range(N_LAYERS):
        w = jnp.asarray(params[2 * layer], jnp.bfloat16)
        b = jnp.asarray(params[2 * layer + 1], jnp.float32).reshape(1, DIMS[layer + 1])
        prepped.append(w)
        prepped.append(b)
    return prepped


@functools.partial(jax.jit, static_argnames=("block_b", "out_dtype"))
def autoencoder_forward(x, params, block_b=1024, out_dtype=jnp.float32):
    """x: (B, 784) f32. params: flat list [w1, b1, ..., w8, b8] (ideally
    pre-cast via prepare_params; casts below are no-ops in that case)."""
    B, D = x.shape
    assert D == DIMS[0]

    # Clamp the batch tile to the (16-padded) batch so tiny batches don't
    # burn compute on padding; if the whole batch fits in a single tile but
    # is big enough, split it into >=2 grid steps so the "parallel" batch
    # axis can shard across both TensorCores on v7x.
    padded_b = _round_up(B, 16)
    eff_block = min(block_b, padded_b)
    if eff_block >= padded_b and padded_b >= 32:
        eff_block = _round_up(pl.cdiv(padded_b, 2), 16)
    eff_block = max(16, _round_up(eff_block, 16))
    grid = (pl.cdiv(B, eff_block),)

    # Defensive dtype normalization (no-op / free when params were prepared
    # outside the jit via prepare_params).
    kernel_params = []
    for layer in range(N_LAYERS):
        kernel_params.append(params[2 * layer].astype(jnp.bfloat16))                # W
        kernel_params.append(
            params[2 * layer + 1].astype(jnp.float32).reshape(1, DIMS[layer + 1]))  # b

    # Input: tile over batch only (f32, cast in-kernel).
    in_specs = [pl.BlockSpec((eff_block, DIMS[0]), lambda i: (i, 0))]
    # Weights/biases: full arrays, constant block index => VMEM-resident
    # across all grid steps.  (Single-buffering them is a minor hygiene win
    # left to the compiler; not forced here.)
    for layer in range(N_LAYERS):
        d_in, d_out = DIMS[layer], DIMS[layer + 1]
        in_specs.append(pl.BlockSpec((d_in, d_out), lambda i: (0, 0)))
        in_specs.append(pl.BlockSpec((1, d_out), lambda i: (0, 0)))

    out_spec = pl.BlockSpec((eff_block, DIMS[-1]), lambda i: (i, 0))

    flops_per_row = 2 * sum(DIMS[l] * DIMS[l + 1] for l in range(N_LAYERS))
    param_bytes = sum(int(p.size) * p.dtype.itemsize for p in kernel_params)
    out_itemsize = jnp.dtype(out_dtype).itemsize
    cost = pl.CostEstimate(
        flops=B * flops_per_row,
        transcendentals=B * DIMS[-1],
        bytes_accessed=B * DIMS[0] * 4 + B * DIMS[-1] * out_itemsize + param_bytes,
    )

    # block_b > 1024 (useful on v5e/v6e with 128 MiB physical VMEM) needs a
    # raised scoped-VMEM limit; the default 1024 tile fits the 32 MiB default.
    compiler_kwargs = dict(dimension_semantics=("parallel",))
    if eff_block > 1024:
        compiler_kwargs["vmem_limit_bytes"] = 64 * 1024 * 1024

    return pl.pallas_call(
        _ae_kernel,
        out_shape=jax.ShapeDtypeStruct((B, DIMS[-1]), out_dtype),
        grid_spec=pltpu.PrefetchScalarGridSpec(
            num_scalar_prefetch=0,
            grid=grid,
            in_specs=in_specs,
            out_specs=out_spec,
        ),
        compiler_params=pltpu.CompilerParams(**compiler_kwargs),
        cost_estimate=cost,
    )(x, *kernel_params)


def init_params(key):
    """Deterministic init mimicking PyTorch Linear default (+/- 1/sqrt(fan_in))."""
    params = []
    for layer in range(N_LAYERS):
        d_in, d_out = DIMS[layer], DIMS[layer + 1]
        key, kw, kb = jax.random.split(key, 3)
        bound = 1.0 / jnp.sqrt(float(d_in))
        w = jax.random.uniform(kw, (d_in, d_out), jnp.float32, -bound, bound)
        b = jax.random.uniform(kb, (1, d_out), jnp.float32, -bound, bound)
        params.append(w)
        params.append(b)
    return params


def reference_forward(x, params):
    """Pure-JAX f32 reference (exact PyTorch-semantics forward)."""
    h = x
    for layer in range(N_LAYERS):
        w = params[2 * layer]
        b = params[2 * layer + 1]
        h = h @ w + b
        if layer < N_LAYERS - 1 and layer != 3:
            h = jnp.maximum(h, 0.0)
    return jnp.tanh(h)


if __name__ == "__main__":
    key = jax.random.PRNGKey(0)
    key, kx = jax.random.split(key)

    B = 16
    x = jax.random.normal(kx, (B, 28 * 28), jnp.float32)
    params = init_params(key)

    # One-time param cast outside the jitted call (bf16 W, f32 b).
    kernel_params = prepare_params(params)

    out = autoencoder_forward(x, kernel_params)  # f32 in, f32 out, bf16 matmuls
    out = jax.block_until_ready(out)

    ref = reference_forward(x, params)
    assert out.shape == (B, 28 * 28), out.shape
    assert out.dtype == jnp.float32, out.dtype
    # bf16 matmul inputs (f32 accumulation) => relaxed tolerance vs f32 ref.
    max_err = float(jnp.max(jnp.abs(out - ref)))
    assert jnp.allclose(out, ref, atol=2e-2, rtol=2e-2), max_err
    print("KERNEL_OK")
</pallas_src>

<mosaic_0001>
module attributes {stable_mosaic.version = 11 : i64} {
  func.func @_ae_kernel(%arg0: i32, %arg1: memref<16x784xf32, #tpu.memory_space<vmem>>, %arg2: memref<784x128xbf16, #tpu.memory_space<vmem>>, %arg3: memref<1x128xf32, #tpu.memory_space<vmem>>, %arg4: memref<128x64xbf16, #tpu.memory_space<vmem>>, %arg5: memref<1x64xf32, #tpu.memory_space<vmem>>, %arg6: memref<64x12xbf16, #tpu.memory_space<vmem>>, %arg7: memref<1x12xf32, #tpu.memory_space<vmem>>, %arg8: memref<12x3xbf16, #tpu.memory_space<vmem>>, %arg9: memref<1x3xf32, #tpu.memory_space<vmem>>, %arg10: memref<3x12xbf16, #tpu.memory_space<vmem>>, %arg11: memref<1x12xf32, #tpu.memory_space<vmem>>, %arg12: memref<12x64xbf16, #tpu.memory_space<vmem>>, %arg13: memref<1x64xf32, #tpu.memory_space<vmem>>, %arg14: memref<64x128xbf16, #tpu.memory_space<vmem>>, %arg15: memref<1x128xf32, #tpu.memory_space<vmem>>, %arg16: memref<128x784xbf16, #tpu.memory_space<vmem>>, %arg17: memref<1x784xf32, #tpu.memory_space<vmem>>, %arg18: memref<16x784xf32, #tpu.memory_space<vmem>>) attributes {dimension_semantics = [#tpu.dimension_semantics<parallel>], iteration_bounds = array<i64: 1>, scalar_prefetch = 0 : i64, scratch_operands = 0 : i64, tpu.core_type = #tpu.core_type<tc>, window_params = [{transform_indices = @transform_0, window_bounds = array<i64: 16, 784>}, {pipeline_mode = #tpu.pipeline_mode<synchronous>, transform_indices = @transform_1, window_bounds = array<i64: 784, 128>}, {pipeline_mode = #tpu.pipeline_mode<synchronous>, transform_indices = @transform_2, window_bounds = array<i64: 1, 128>}, {pipeline_mode = #tpu.pipeline_mode<synchronous>, transform_indices = @transform_3, window_bounds = array<i64: 128, 64>}, {pipeline_mode = #tpu.pipeline_mode<synchronous>, transform_indices = @transform_4, window_bounds = array<i64: 1, 64>}, {pipeline_mode = #tpu.pipeline_mode<synchronous>, transform_indices = @transform_5, window_bounds = array<i64: 64, 12>}, {pipeline_mode = #tpu.pipeline_mode<synchronous>, transform_indices = @transform_6, window_bounds = array<i64: 1, 12>}, {pipeline_mode = #tpu.pipeline_mode<synchronous>, transform_indices = @transform_7, window_bounds = array<i64: 12, 3>}, {pipeline_mode = #tpu.pipeline_mode<synchronous>, transform_indices = @transform_8, window_bounds = array<i64: 1, 3>}, {pipeline_mode = #tpu.pipeline_mode<synchronous>, transform_indices = @transform_9, window_bounds = array<i64: 3, 12>}, {pipeline_mode = #tpu.pipeline_mode<synchronous>, transform_indices = @transform_10, window_bounds = array<i64: 1, 12>}, {pipeline_mode = #tpu.pipeline_mode<synchronous>, transform_indices = @transform_11, window_bounds = array<i64: 12, 64>}, {pipeline_mode = #tpu.pipeline_mode<synchronous>, transform_indices = @transform_12, window_bounds = array<i64: 1, 64>}, {pipeline_mode = #tpu.pipeline_mode<synchronous>, transform_indices = @transform_13, window_bounds = array<i64: 64, 128>}, {pipeline_mode = #tpu.pipeline_mode<synchronous>, transform_indices = @transform_14, window_bounds = array<i64: 1, 128>}, {pipeline_mode = #tpu.pipeline_mode<synchronous>, transform_indices = @transform_15, window_bounds = array<i64: 128, 784>}, {pipeline_mode = #tpu.pipeline_mode<synchronous>, transform_indices = @transform_16, window_bounds = array<i64: 1, 784>}, {transform_indices = @transform_17, window_bounds = array<i64: 16, 784>}]} {
    %c0 = arith.constant 0 : index
    %c0_0 = arith.constant 0 : index
    %0 = vector.load %arg1[%c0, %c0_0] : memref<16x784xf32, #tpu.memory_space<vmem>>, vector<16x784xf32>
    %c0_1 = arith.constant 0 : index
    %c0_2 = arith.constant 0 : index
    %1 = vector.load %arg2[%c0_1, %c0_2] : memref<784x128xbf16, #tpu.memory_space<vmem>>, vector<784x128xbf16>
    %c0_3 = arith.constant 0 : index
    %c0_4 = arith.constant 0 : index
    %2 = vector.load %arg3[%c0_3, %c0_4] : memref<1x128xf32, #tpu.memory_space<vmem>>, vector<1x128xf32>
    %3 = arith.truncf %0 : vector<16x784xf32> to vector<16x784xbf16>
    %cst = arith.constant dense<0.000000e+00> : vector<16x128xf32>
    %4 = tpu.matmul %3, %1, %cst {dimension_numbers = #tpu.dot_dimension_numbers<[1], [0], [0], [1], [0, 0, 1, 1], [], []>} : vector<16x784xbf16>, vector<784x128xbf16>, vector<16x128xf32> -> vector<16x128xf32>
    %5 = vector.broadcast %2 : vector<1x128xf32> to vector<16x128xf32>
    %6 = arith.addf %4, %5 : vector<16x128xf32>
    %cst_5 = arith.constant 0.000000e+00 : f32
    %7 = vector.broadcast %cst_5 : f32 to vector<16x128xf32>
    %8 = arith.maximumf %6, %7 : vector<16x128xf32>
    %c0_6 = arith.constant 0 : index
    %c0_7 = arith.constant 0 : index
    %9 = vector.load %arg4[%c0_6, %c0_7] : memref<128x64xbf16, #tpu.memory_space<vmem>>, vector<128x64xbf16>
    %c0_8 = arith.constant 0 : index
    %c0_9 = arith.constant 0 : index
    %10 = vector.load %arg5[%c0_8, %c0_9] : memref<1x64xf32, #tpu.memory_space<vmem>>, vector<1x64xf32>
    %11 = arith.truncf %8 : vector<16x128xf32> to vector<16x128xbf16>
    %cst_10 = arith.constant dense<0.000000e+00> : vector<16x64xf32>
    %12 = tpu.matmul %11, %9, %cst_10 {dimension_numbers = #tpu.dot_dimension_numbers<[1], [0], [0], [1], [0, 0, 1, 1], [], []>} : vector<16x128xbf16>, vector<128x64xbf16>, vector<16x64xf32> -> vector<16x64xf32>
    %13 = vector.broadcast %10 : vector<1x64xf32> to vector<16x64xf32>
    %14 = arith.addf %12, %13 : vector<16x64xf32>
    %cst_11 = arith.constant 0.000000e+00 : f32
    %15 = vector.broadcast %cst_11 : f32 to vector<16x64xf32>
    %16 = arith.maximumf %14, %15 : vector<16x64xf32>
    %c0_12 = arith.constant 0 : index
    %c0_13 = arith.constant 0 : index
    %17 = vector.load %arg6[%c0_12, %c0_13] : memref<64x12xbf16, #tpu.memory_space<vmem>>, vector<64x12xbf16>
    %c0_14 = arith.constant 0 : index
    %c0_15 = arith.constant 0 : index
    %18 = vector.load %arg7[%c0_14, %c0_15] : memref<1x12xf32, #tpu.memory_space<vmem>>, vector<1x12xf32>
    %19 = arith.truncf %16 : vector<16x64xf32> to vector<16x64xbf16>
    %cst_16 = arith.constant dense<0.000000e+00> : vector<16x12xf32>
    %20 = tpu.matmul %19, %17, %cst_16 {dimension_numbers = #tpu.dot_dimension_numbers<[1], [0], [0], [1], [0, 0, 1, 1], [], []>} : vector<16x64xbf16>, vector<64x12xbf16>, vector<16x12xf32> -> vector<16x12xf32>
    %21 = vector.broadcast %18 : vector<1x12xf32> to vector<16x12xf32>
    %22 = arith.addf %20, %21 : vector<16x12xf32>
    %cst_17 = arith.constant 0.000000e+00 : f32
    %23 = vector.broadcast %cst_17 : f32 to vector<16x12xf32>
    %24 = arith.maximumf %22, %23 : vector<16x12xf32>
    %c0_18 = arith.constant 0 : index
    %c0_19 = arith.constant 0 : index
    %25 = vector.load %arg8[%c0_18, %c0_19] : memref<12x3xbf16, #tpu.memory_space<vmem>>, vector<12x3xbf16>
    %c0_20 = arith.constant 0 : index
    %c0_21 = arith.constant 0 : index
    %26 = vector.load %arg9[%c0_20, %c0_21] : memref<1x3xf32, #tpu.memory_space<vmem>>, vector<1x3xf32>
    %27 = arith.truncf %24 : vector<16x12xf32> to vector<16x12xbf16>
    %cst_22 = arith.constant dense<0.000000e+00> : vector<16x3xf32>
    %28 = tpu.matmul %27, %25, %cst_22 {dimension_numbers = #tpu.dot_dimension_numbers<[1], [0], [0], [1], [0, 0, 1, 1], [], []>} : vector<16x12xbf16>, vector<12x3xbf16>, vector<16x3xf32> -> vector<16x3xf32>
    %29 = vector.broadcast %26 : vector<1x3xf32> to vector<16x3xf32>
    %30 = arith.addf %28, %29 : vector<16x3xf32>
    %c0_23 = arith.constant 0 : index
    %c0_24 = arith.constant 0 : index
    %31 = vector.load %arg10[%c0_23, %c0_24] : memref<3x12xbf16, #tpu.memory_space<vmem>>, vector<3x12xbf16>
    %c0_25 = arith.constant 0 : index
    %c0_26 = arith.constant 0 : index
    %32 = vector.load %arg11[%c0_25, %c0_26] : memref<1x12xf32, #tpu.memory_space<vmem>>, vector<1x12xf32>
    %33 = arith.truncf %30 : vector<16x3xf32> to vector<16x3xbf16>
    %cst_27 = arith.constant dense<0.000000e+00> : vector<16x12xf32>
    %34 = tpu.matmul %33, %31, %cst_27 {dimension_numbers = #tpu.dot_dimension_numbers<[1], [0], [0], [1], [0, 0, 1, 1], [], []>} : vector<16x3xbf16>, vector<3x12xbf16>, vector<16x12xf32> -> vector<16x12xf32>
    %35 = vector.broadcast %32 : vector<1x12xf32> to vector<16x12xf32>
    %36 = arith.addf %34, %35 : vector<16x12xf32>
    %cst_28 = arith.constant 0.000000e+00 : f32
    %37 = vector.broadcast %cst_28 : f32 to vector<16x12xf32>
    %38 = arith.maximumf %36, %37 : vector<16x12xf32>
    %c0_29 = arith.constant 0 : index
    %c0_30 = arith.constant 0 : index
    %39 = vector.load %arg12[%c0_29, %c0_30] : memref<12x64xbf16, #tpu.memory_space<vmem>>, vector<12x64xbf16>
    %c0_31 = arith.constant 0 : index
    %c0_32 = arith.constant 0 : index
    %40 = vector.load %arg13[%c0_31, %c0_32] : memref<1x64xf32, #tpu.memory_space<vmem>>, vector<1x64xf32>
    %41 = arith.truncf %38 : vector<16x12xf32> to vector<16x12xbf16>
    %cst_33 = arith.constant dense<0.000000e+00> : vector<16x64xf32>
    %42 = tpu.matmul %41, %39, %cst_33 {dimension_numbers = #tpu.dot_dimension_numbers<[1], [0], [0], [1], [0, 0, 1, 1], [], []>} : vector<16x12xbf16>, vector<12x64xbf16>, vector<16x64xf32> -> vector<16x64xf32>
    %43 = vector.broadcast %40 : vector<1x64xf32> to vector<16x64xf32>
    %44 = arith.addf %42, %43 : vector<16x64xf32>
    %cst_34 = arith.constant 0.000000e+00 : f32
    %45 = vector.broadcast %cst_34 : f32 to vector<16x64xf32>
    %46 = arith.maximumf %44, %45 : vector<16x64xf32>
    %c0_35 = arith.constant 0 : index
    %c0_36 = arith.constant 0 : index
    %47 = vector.load %arg14[%c0_35, %c0_36] : memref<64x128xbf16, #tpu.memory_space<vmem>>, vector<64x128xbf16>
    %c0_37 = arith.constant 0 : index
    %c0_38 = arith.constant 0 : index
    %48 = vector.load %arg15[%c0_37, %c0_38] : memref<1x128xf32, #tpu.memory_space<vmem>>, vector<1x128xf32>
    %49 = arith.truncf %46 : vector<16x64xf32> to vector<16x64xbf16>
    %cst_39 = arith.constant dense<0.000000e+00> : vector<16x128xf32>
    %50 = tpu.matmul %49, %47, %cst_39 {dimension_numbers = #tpu.dot_dimension_numbers<[1], [0], [0], [1], [0, 0, 1, 1], [], []>} : vector<16x64xbf16>, vector<64x128xbf16>, vector<16x128xf32> -> vector<16x128xf32>
    %51 = vector.broadcast %48 : vector<1x128xf32> to vector<16x128xf32>
    %52 = arith.addf %50, %51 : vector<16x128xf32>
    %cst_40 = arith.constant 0.000000e+00 : f32
    %53 = vector.broadcast %cst_40 : f32 to vector<16x128xf32>
    %54 = arith.maximumf %52, %53 : vector<16x128xf32>
    %c0_41 = arith.constant 0 : index
    %c0_42 = arith.constant 0 : index
    %55 = vector.load %arg16[%c0_41, %c0_42] : memref<128x784xbf16, #tpu.memory_space<vmem>>, vector<128x784xbf16>
    %c0_43 = arith.constant 0 : index
    %c0_44 = arith.constant 0 : index
    %56 = vector.load %arg17[%c0_43, %c0_44] : memref<1x784xf32, #tpu.memory_space<vmem>>, vector<1x784xf32>
    %57 = arith.truncf %54 : vector<16x128xf32> to vector<16x128xbf16>
    %cst_45 = arith.constant dense<0.000000e+00> : vector<16x784xf32>
    %58 = tpu.matmul %57, %55, %cst_45 {dimension_numbers = #tpu.dot_dimension_numbers<[1], [0], [0], [1], [0, 0, 1, 1], [], []>} : vector<16x128xbf16>, vector<128x784xbf16>, vector<16x784xf32> -> vector<16x784xf32>
    %59 = vector.broadcast %56 : vector<1x784xf32> to vector<16x784xf32>
    %60 = arith.addf %58, %59 : vector<16x784xf32>
    %61 = math.tanh %60 : vector<16x784xf32>
    %c0_46 = arith.constant 0 : index
    %c0_47 = arith.constant 0 : index
    %62 = vector.load %arg18[%c0_46, %c0_47] : memref<16x784xf32, #tpu.memory_space<vmem>>, vector<16x784xf32>
    tpu.vector_store %arg18[%c0_46, %c0_47], %61 {strides = array<i32>} : memref<16x784xf32, #tpu.memory_space<vmem>>, vector<16x784xf32>,
    return
  }
  func.func @transform_0(%arg0: i32) -> (i32, i32) {
    %c0_i32 = arith.constant 0 : i32
    %c0_i32_0 = arith.constant 0 : i32
    return %arg0, %c0_i32 : i32, i32
  }
  func.func @transform_1(%arg0: i32) -> (i32, i32) {
    %c0_i32 = arith.constant 0 : i32
    %c0_i32_0 = arith.constant 0 : i32
    %c0_i32_1 = arith.constant 0 : i32
    return %c0_i32, %c0_i32_0 : i32, i32
  }
  func.func @transform_2(%arg0: i32) -> (i32, i32) {
    %c0_i32 = arith.constant 0 : i32
    %c0_i32_0 = arith.constant 0 : i32
    %c0_i32_1 = arith.constant 0 : i32
    return %c0_i32, %c0_i32_0 : i32, i32
  }
  func.func @transform_3(%arg0: i32) -> (i32, i32) {
    %c0_i32 = arith.constant 0 : i32
    %c0_i32_0 = arith.constant 0 : i32
    %c0_i32_1 = arith.constant 0 : i32
    return %c0_i32, %c0_i32_0 : i32, i32
  }
  func.func @transform_4(%arg0: i32) -> (i32, i32) {
    %c0_i32 = arith.constant 0 : i32
    %c0_i32_0 = arith.constant 0 : i32
    %c0_i32_1 = arith.constant 0 : i32
    return %c0_i32, %c0_i32_0 : i32, i32
  }
  func.func @transform_5(%arg0: i32) -> (i32, i32) {
    %c0_i32 = arith.constant 0 : i32
    %c0_i32_0 = arith.constant 0 : i32
    %c0_i32_1 = arith.constant 0 : i32
    return %c0_i32, %c0_i32_0 : i32, i32
  }
  func.func @transform_6(%arg0: i32) -> (i32, i32) {
    %c0_i32 = arith.constant 0 : i32
    %c0_i32_0 = arith.constant 0 : i32
    %c0_i32_1 = arith.constant 0 : i32
    return %c0_i32, %c0_i32_0 : i32, i32
  }
  func.func @transform_7(%arg0: i32) -> (i32, i32) {
    %c0_i32 = arith.constant 0 : i32
    %c0_i32_0 = arith.constant 0 : i32
    %c0_i32_1 = arith.constant 0 : i32
    return %c0_i32, %c0_i32_0 : i32, i32
  }
  func.func @transform_8(%arg0: i32) -> (i32, i32) {
    %c0_i32 = arith.constant 0 : i32
    %c0_i32_0 = arith.constant 0 : i32
    %c0_i32_1 = arith.constant 0 : i32
    return %c0_i32, %c0_i32_0 : i32, i32
  }
  func.func @transform_9(%arg0: i32) -> (i32, i32) {
    %c0_i32 = arith.constant 0 : i32
    %c0_i32_0 = arith.constant 0 : i32
    %c0_i32_1 = arith.constant 0 : i32
    return %c0_i32, %c0_i32_0 : i32, i32
  }
  func.func @transform_10(%arg0: i32) -> (i32, i32) {
    %c0_i32 = arith.constant 0 : i32
    %c0_i32_0 = arith.constant 0 : i32
    %c0_i32_1 = arith.constant 0 : i32
    return %c0_i32, %c0_i32_0 : i32, i32
  }
  func.func @transform_11(%arg0: i32) -> (i32, i32) {
    %c0_i32 = arith.constant 0 : i32
    %c0_i32_0 = arith.constant 0 : i32
    %c0_i32_1 = arith.constant 0 : i32
    return %c0_i32, %c0_i32_0 : i32, i32
  }
  func.func @transform_12(%arg0: i32) -> (i32, i32) {
    %c0_i32 = arith.constant 0 : i32
    %c0_i32_0 = arith.constant 0 : i32
    %c0_i32_1 = arith.constant 0 : i32
    return %c0_i32, %c0_i32_0 : i32, i32
  }
  func.func @transform_13(%arg0: i32) -> (i32, i32) {
    %c0_i32 = arith.constant 0 : i32
    %c0_i32_0 = arith.constant 0 : i32
    %c0_i32_1 = arith.constant 0 : i32
    return %c0_i32, %c0_i32_0 : i32, i32
  }
  func.func @transform_14(%arg0: i32) -> (i32, i32) {
    %c0_i32 = arith.constant 0 : i32
    %c0_i32_0 = arith.constant 0 : i32
    %c0_i32_1 = arith.constant 0 : i32
    return %c0_i32, %c0_i32_0 : i32, i32
  }
  func.func @transform_15(%arg0: i32) -> (i32, i32) {
    %c0_i32 = arith.constant 0 : i32
    %c0_i32_0 = arith.constant 0 : i32
    %c0_i32_1 = arith.constant 0 : i32
    return %c0_i32, %c0_i32_0 : i32, i32
  }
  func.func @transform_16(%arg0: i32) -> (i32, i32) {
    %c0_i32 = arith.constant 0 : i32
    %c0_i32_0 = arith.constant 0 : i32
    %c0_i32_1 = arith.constant 0 : i32
    return %c0_i32, %c0_i32_0 : i32, i32
  }
  func.func @transform_17(%arg0: i32) -> (i32, i32) {
    %c0_i32 = arith.constant 0 : i32
    %c0_i32_0 = arith.constant 0 : i32
    return %arg0, %c0_i32 : i32, i32
  }
}

</mosaic_0001>

<llo_original>
// kernel: autoencoder_forward.1
$region0: #{autoencoder_forward.1}
  #allocation0 [shape = 'u32[]', space=smem, size = 0x4, offset = 0x4, fixed_abs, tag = 'smem constant byte address 0x4 - core index']
  #allocation1 [shape = 'u32[72,128]{1,0:T(1,128)}', space=vmem, size = 0x9000, scoped, tag = 'internal scratch']
  %s0 = inlined_call_operand.vmem [shape: f32[16,784], index: 0, kind: input, shape index: {}]
  %s1 = inlined_call_operand.vmem [shape: bf16[784,128], index: 1, kind: input, shape index: {}]
  %s2 = inlined_call_operand.vmem [shape: f32[1,128], index: 2, kind: input, shape index: {}]
  %s3 = inlined_call_operand.vmem [shape: bf16[128,64], index: 3, kind: input, shape index: {}]
  %s4 = inlined_call_operand.vmem [shape: f32[1,64], index: 4, kind: input, shape index: {}]
  %s5 = inlined_call_operand.vmem [shape: bf16[64,12], index: 5, kind: input, shape index: {}]
  %s6 = inlined_call_operand.vmem [shape: f32[1,12], index: 6, kind: input, shape index: {}]
  %s7 = inlined_call_operand.vmem [shape: bf16[12,3], index: 7, kind: input, shape index: {}]
  %s8 = inlined_call_operand.vmem [shape: f32[1,3], index: 8, kind: input, shape index: {}]
  %s9 = inlined_call_operand.vmem [shape: bf16[3,12], index: 9, kind: input, shape index: {}]
  %s10 = inlined_call_operand.vmem [shape: f32[1,12], index: 10, kind: input, shape index: {}]
  %s11 = inlined_call_operand.vmem [shape: bf16[12,64], index: 11, kind: input, shape index: {}]
  %s12 = inlined_call_operand.vmem [shape: f32[1,64], index: 12, kind: input, shape index: {}]
  %s13 = inlined_call_operand.vmem [shape: bf16[64,128], index: 13, kind: input, shape index: {}]
  %s14 = inlined_call_operand.vmem [shape: f32[1,128], index: 14, kind: input, shape index: {}]
  %s15 = inlined_call_operand.vmem [shape: bf16[128,784], index: 15, kind: input, shape index: {}]
  %s16 = inlined_call_operand.vmem [shape: f32[1,784], index: 16, kind: input, shape index: {}]
  %s17 = inlined_call_operand.hbm [shape: f32[16,784], index: 17, kind: output, shape index: {}]
  %s18 = sld [smem:[#allocation0]]
  $region78: #{autoencoder_forward.1} parent=0
    _
  %s20 = ssub.s32 1, %s18
  %s21 = scalar_select 0, %s20, %s18
  $region1: #{autoencoder_forward.1} parent=0
    #allocation2 [shape = 'u8[57344]{0}', space=vmem, size = 0xe000, scoped, tag = 'output window, operand 0, single buffered']
    #allocation3 [shape = 's32[1]{0}', space=sflag, size = 0x4, scoped, tag = 'scoped memory for autoencoder_forward.1']
    %22 = vsyncpa [#allocation3], 0
    // Predicated region
    $region2: #{autoencoder_forward.1} parent=1 // pred_check
      _
    $region3: #{autoencoder_forward.1} parent=1 // pred_check_branch
      %24 = sbr.rel (0) target = $region5
    $region4: #{autoencoder_forward.1} parent=1 // pred_region
      _
    $region5: #{autoencoder_forward.1} parent=1 // pred_fallthru
      _
    // Predicated region
    $region6: #{autoencoder_forward.1} parent=1 // pred_check
      _
    $region7: #{autoencoder_forward.1} parent=1 // pred_check_branch
      %26 = sbr.rel (0) target = $region9
    $region8: #{autoencoder_forward.1} parent=1 // pred_region
      _
    $region9: #{autoencoder_forward.1} parent=1 // pred_fallthru
      _
    // Predicated region
    $region10: #{autoencoder_forward.1} parent=1 // pred_check
      _
    $region11: #{autoencoder_forward.1} parent=1 // pred_check_branch
      %28 = sbr.rel (0) target = $region13
    $region12: #{autoencoder_forward.1} parent=1 // pred_region
      _
    $region13: #{autoencoder_forward.1} parent=1 // pred_fallthru
      _
    // Predicated region
    $region14: #{autoencoder_forward.1} parent=1 // pred_check
      _
    $region15: #{autoencoder_forward.1} parent=1 // pred_check_branch
      %30 = sbr.rel (0) target = $region17
    $region16: #{autoencoder_forward.1} parent=1 // pred_region
      _
    $region17: #{autoencoder_forward.1} parent=1 // pred_fallthru
      _
    // Predicated region
    $region18: #{autoencoder_forward.1} parent=1 // pred_check
      _
    $region19: #{autoencoder_forward.1} parent=1 // pred_check_branch
      %32 = sbr.rel (0) target = $region21
    $region20: #{autoencoder_forward.1} parent=1 // pred_region
      _
    $region21: #{autoencoder_forward.1} parent=1 // pred_fallthru
      _
    // Predicated region
    $region22: #{autoencoder_forward.1} parent=1 // pred_check
      _
    $region23: #{autoencoder_forward.1} parent=1 // pred_check_branch
      %34 = sbr.rel (0) target = $region25
    $region24: #{autoencoder_forward.1} parent=1 // pred_region
      _
    $region25: #{autoencoder_forward.1} parent=1 // pred_fallthru
      _
    // Predicated region
    $region26: #{autoencoder_forward.1} parent=1 // pred_check
      _
    $region27: #{autoencoder_forward.1} parent=1 // pred_check_branch
      %36 = sbr.rel (0) target = $region29
    $region28: #{autoencoder_forward.1} parent=1 // pred_region
      _
    $region29: #{autoencoder_forward.1} parent=1 // pred_fallthru
      _
    // Predicated region
    $region30: #{autoencoder_forward.1} parent=1 // pred_check
      _
    $region31: #{autoencoder_forward.1} parent=1 // pred_check_branch
      %38 = sbr.rel (0) target = $region33
    $region32: #{autoencoder_forward.1} parent=1 // pred_region
      _
    $region33: #{autoencoder_forward.1} parent=1 // pred_fallthru
      _
    // Predicated region
    $region34: #{autoencoder_forward.1} parent=1 // pred_check
      _
    $region35: #{autoencoder_forward.1} parent=1 // pred_check_branch
      %40 = sbr.rel (0) target = $region37
    $region36: #{autoencoder_forward.1} parent=1 // pred_region
      _
    $region37: #{autoencoder_forward.1} parent=1 // pred_fallthru
      _
    // Predicated region
    $region38: #{autoencoder_forward.1} parent=1 // pred_check
      _
    $region39: #{autoencoder_forward.1} parent=1 // pred_check_branch
      %42 = sbr.rel (0) target = $region41
    $region40: #{autoencoder_forward.1} parent=1 // pred_region
      _
    $region41: #{autoencoder_forward.1} parent=1 // pred_fallthru
      _
    // Predicated region
    $region42: #{autoencoder_forward.1} parent=1 // pred_check
      _
    $region43: #{autoencoder_forward.1} parent=1 // pred_check_branch
      %44 = sbr.rel (0) target = $region45
    $region44: #{autoencoder_forward.1} parent=1 // pred_region
      _
    $region45: #{autoencoder_forward.1} parent=1 // pred_fallthru
      _
    // Predicated region
    $region46: #{autoencoder_forward.1} parent=1 // pred_check
      _
    $region47: #{autoencoder_forward.1} parent=1 // pred_check_branch
      %46 = sbr.rel (0) target = $region49
    $region48: #{autoencoder_forward.1} parent=1 // pred_region
      _
    $region49: #{autoencoder_forward.1} parent=1 // pred_fallthru
      _
    // Predicated region
    $region50: #{autoencoder_forward.1} parent=1 // pred_check
      _
    $region51: #{autoencoder_forward.1} parent=1 // pred_check_branch
      %48 = sbr.rel (0) target = $region53
    $region52: #{autoencoder_forward.1} parent=1 // pred_region
      _
    $region53: #{autoencoder_forward.1} parent=1 // pred_fallthru
      _
    // Predicated region
    $region54: #{autoencoder_forward.1} parent=1 // pred_check
      _
    $region55: #{autoencoder_forward.1} parent=1 // pred_check_branch
      %50 = sbr.rel (0) target = $region57
    $region56: #{autoencoder_forward.1} parent=1 // pred_region
      _
    $region57: #{autoencoder_forward.1} parent=1 // pred_fallthru
      _
    // Predicated region
    $region58: #{autoencoder_forward.1} parent=1 // pred_check
      _
    $region59: #{autoencoder_forward.1} parent=1 // pred_check_branch
      %52 = sbr.rel (0) target = $region61
    $region60: #{autoencoder_forward.1} parent=1 // pred_region
      _
    $region61: #{autoencoder_forward.1} parent=1 // pred_fallthru
      _
    // Predicated region
    $region62: #{autoencoder_forward.1} parent=1 // pred_check
      _
    $region63: #{autoencoder_forward.1} parent=1 // pred_check_branch
      %54 = sbr.rel (0) target = $region65
    $region64: #{autoencoder_forward.1} parent=1 // pred_region
      _
    $region65: #{autoencoder_forward.1} parent=1 // pred_fallthru
      _
    // Predicated region
    $region66: #{autoencoder_forward.1} parent=1 // pred_check
      _
    $region67: #{autoencoder_forward.1} parent=1 // pred_check_branch
      %56 = sbr.rel (0) target = $region69
    $region68: #{autoencoder_forward.1} parent=1 // pred_region
      _
    $region69: #{autoencoder_forward.1} parent=1 // pred_fallthru
      _
    %v58 = vld [vmem:[%s0] sm:$0xff]
    %v59 = vld [vmem:[%s0 + $0x8] sm:$0xff]
    %v60 = vld [vmem:[%s0 + $0x10] sm:$0xff]
    %v61 = vld [vmem:[%s0 + $0x18] sm:$0xff]
    %v62 = vld [vmem:[%s0 + $0x20] sm:$0xff]
    %v63 = vld [vmem:[%s0 + $0x28] sm:$0xff]
    %v64 = vld [vmem:[%s0 + $0x30] sm:$0xff]
    %v65 = vld [vmem:[%s0 + $0x38] sm:$0xff]
    %v66 = vld [vmem:[%s0 + $0x40] sm:$0xff]
    %v67 = vld [vmem:[%s0 + $0x48] sm:$0xff]
    %v68 = vld [vmem:[%s0 + $0x50] sm:$0xff]
    %v69 = vld [vmem:[%s0 + $0x58] sm:$0xff]
    %v70 = vld [vmem:[%s0 + $0x60] sm:$0xff]
    %v71 = vld [vmem:[%s0 + $0x68] sm:$0xff]
    %v72 = vld [vmem:[%s1] sm:$0xf]
    %v73 = vld [vmem:[%s1 + $0x4] sm:$0xf]
    %v74 = vld [vmem:[%s1 + $0x8] sm:$0xf]
    %v75 = vld [vmem:[%s1 + $0xc] sm:$0xf]
    %v76 = vld [vmem:[%s1 + $0x10] sm:$0xf]
    %v77 = vld [vmem:[%s1 + $0x14] sm:$0xf]
    %v78 = vld [vmem:[%s1 + $0x18] sm:$0xf]
    %v79 = vld [vmem:[%s1 + $0x1c] sm:$0xf]
    %v80 = vld [vmem:[%s1 + $0x20] sm:$0xf]
    %v81 = vld [vmem:[%s1 + $0x24] sm:$0xf]
    %v82 = vld [vmem:[%s1 + $0x28] sm:$0xf]
    %v83 = vld [vmem:[%s1 + $0x2c] sm:$0xf]
    %v84 = vld [vmem:[%s1 + $0x30] sm:$0xf]
    %v85 = vld [vmem:[%s1 + $0x34] sm:$0xf]
    %v86 = vld [vmem:[%s1 + $0x38] sm:$0xf]
    %v87 = vld [vmem:[%s1 + $0x3c] sm:$0xf]
    %v88 = vld [vmem:[%s1 + $0x40] sm:$0xf]
    %v89 = vld [vmem:[%s1 + $0x44] sm:$0xf]
    %v90 = vld [vmem:[%s1 + $0x48] sm:$0xf]
    %v91 = vld [vmem:[%s1 + $0x4c] sm:$0xf]
    %v92 = vld [vmem:[%s1 + $0x50] sm:$0xf]
    %v93 = vld [vmem:[%s1 + $0x54] sm:$0xf]
    %v94 = vld [vmem:[%s1 + $0x58] sm:$0xf]
    %v95 = vld [vmem:[%s1 + $0x5c] sm:$0xf]
    %v96 = vld [vmem:[%s1 + $0x60] sm:$0xf]
    %v97 = vld [vmem:[%s1 + $0x64] sm:$0xf]
    %v98 = vld [vmem:[%s1 + $0x68] sm:$0xf]
    %v99 = vld [vmem:[%s1 + $0x6c] sm:$0xf]
    %v100 = vld [vmem:[%s1 + $0x70] sm:$0xf]
    %v101 = vld [vmem:[%s1 + $0x74] sm:$0xf]
    %v102 = vld [vmem:[%s1 + $0x78] sm:$0xf]
    %v103 = vld [vmem:[%s1 + $0x7c] sm:$0xf]
    %v104 = vld [vmem:[%s1 + $0x80] sm:$0xf]
    %v105 = vld [vmem:[%s1 + $0x84] sm:$0xf]
    %v106 = vld [vmem:[%s1 + $0x88] sm:$0xf]
    %v107 = vld [vmem:[%s1 + $0x8c] sm:$0xf]
    %v108 = vld [vmem:[%s1 + $0x90] sm:$0xf]
    %v109 = vld [vmem:[%s1 + $0x94] sm:$0xf]
    %v110 = vld [vmem:[%s1 + $0x98] sm:$0xf]
    %v111 = vld [vmem:[%s1 + $0x9c] sm:$0xf]
    %v112 = vld [vmem:[%s1 + $0xa0] sm:$0xf]
    %v113 = vld [vmem:[%s1 + $0xa4] sm:$0xf]
    %v114 = vld [vmem:[%s1 + $0xa8] sm:$0xf]
    %v115 = vld [vmem:[%s1 + $0xac] sm:$0xf]
    %v116 = vld [vmem:[%s1 + $0xb0] sm:$0xf]
    %v117 = vld [vmem:[%s1 + $0xb4] sm:$0xf]
    %v118 = vld [vmem:[%s1 + $0xb8] sm:$0xf]
    %v119 = vld [vmem:[%s1 + $0xbc] sm:$0xf]
    %v120 = vld [vmem:[%s1 + $0xc0] sm:$0xf]
    %v121 = vld [vmem:[%s1 + $0xc4] sm:$0xf]
    %v122 = vld [vmem:[%s1 + $0xc8] sm:$0xf]
    %v123 = vld [vmem:[%s1 + $0xcc] sm:$0xf]
    %v124 = vld [vmem:[%s1 + $0xd0] sm:$0xf]
    %v125 = vld [vmem:[%s1 + $0xd4] sm:$0xf]
    %v126 = vld [vmem:[%s1 + $0xd8] sm:$0xf]
    %v127 = vld [vmem:[%s1 + $0xdc] sm:$0xf]
    %v128 = vld [vmem:[%s1 + $0xe0] sm:$0xf]
    %v129 = vld [vmem:[%s1 + $0xe4] sm:$0xf]
    %v130 = vld [vmem:[%s1 + $0xe8] sm:$0xf]
    %v131 = vld [vmem:[%s1 + $0xec] sm:$0xf]
    %v132 = vld [vmem:[%s1 + $0xf0] sm:$0xf]
    %v133 = vld [vmem:[%s1 + $0xf4] sm:$0xf]
    %v134 = vld [vmem:[%s1 + $0xf8] sm:$0xf]
    %v135 = vld [vmem:[%s1 + $0xfc] sm:$0xf]
    %v136 = vld [vmem:[%s1 + $0x100] sm:$0xf]
    %v137 = vld [vmem:[%s1 + $0x104] sm:$0xf]
    %v138 = vld [vmem:[%s1 + $0x108] sm:$0xf]
    %v139 = vld [vmem:[%s1 + $0x10c] sm:$0xf]
    %v140 = vld [vmem:[%s1 + $0x110] sm:$0xf]
    %v141 = vld [vmem:[%s1 + $0x114] sm:$0xf]
    %v142 = vld [vmem:[%s1 + $0x118] sm:$0xf]
    %v143 = vld [vmem:[%s1 + $0x11c] sm:$0xf]
    %v144 = vld [vmem:[%s1 + $0x120] sm:$0xf]
    %v145 = vld [vmem:[%s1 + $0x124] sm:$0xf]
    %v146 = vld [vmem:[%s1 + $0x128] sm:$0xf]
    %v147 = vld [vmem:[%s1 + $0x12c] sm:$0xf]
    %v148 = vld [vmem:[%s1 + $0x130] sm:$0xf]
    %v149 = vld [vmem:[%s1 + $0x134] sm:$0xf]
    %v150 = vld [vmem:[%s1 + $0x138] sm:$0xf]
    %v151 = vld [vmem:[%s1 + $0x13c] sm:$0xf]
    %v152 = vld [vmem:[%s1 + $0x140] sm:$0xf]
    %v153 = vld [vmem:[%s1 + $0x144] sm:$0xf]
    %v154 = vld [vmem:[%s1 + $0x148] sm:$0xf]
    %v155 = vld [vmem:[%s1 + $0x14c] sm:$0xf]
    %v156 = vld [vmem:[%s1 + $0x150] sm:$0xf]
    %v157 = vld [vmem:[%s1 + $0x154] sm:$0xf]
    %v158 = vld [vmem:[%s1 + $0x158] sm:$0xf]
    %v159 = vld [vmem:[%s1 + $0x15c] sm:$0xf]
    %v160 = vld [vmem:[%s1 + $0x160] sm:$0xf]
    %v161 = vld [vmem:[%s1 + $0x164] sm:$0xf]
    %v162 = vld [vmem:[%s1 + $0x168] sm:$0xf]
    %v163 = vld [vmem:[%s1 + $0x16c] sm:$0xf]
    %v164 = vld [vmem:[%s1 + $0x170] sm:$0xf]
    %v165 = vld [vmem:[%s1 + $0x174] sm:$0xf]
    %v166 = vld [vmem:[%s1 + $0x178] sm:$0xf]
    %v167 = vld [vmem:[%s1 + $0x17c] sm:$0xf]
    %v168 = vld [vmem:[%s1 + $0x180] sm:$0xf]
    %v169 = vld [vmem:[%s1 + $0x184] sm:$0xf]
    %v170 = vld [vmem:[%s2] sm:$0x1]
    %v171 = vpack.c.bf16 %v65, %v58
    %v172 = vpack.c.bf16 %v66, %v59
    %v173 = vpack.c.bf16 %v67, %v60
    %v174 = vpack.c.bf16 %v68, %v61
    %v175 = vpack.c.bf16 %v69, %v62
    %v176 = vpack.c.bf16 %v70, %v63
    %v177 = vpack.c.bf16 %v71, %v64
    %v179 = vperm.slane %v170, 0
    %v279 = vunpack.c.l.b16 %v72
    %v280 = vunpack.c.l.b16 %v73
    %v281 = vunpack.c.l.b16 %v74
    %v282 = vunpack.c.l.b16 %v75
    %v283 = vunpack.c.l.b16 %v76
    %v284 = vunpack.c.l.b16 %v77
    %v285 = vunpack.c.l.b16 %v78
    %v286 = vunpack.c.l.b16 %v79
    %v287 = vunpack.c.l.b16 %v80
    %v288 = vunpack.c.l.b16 %v81
    %v289 = vunpack.c.l.b16 %v82
    %v290 = vunpack.c.l.b16 %v83
    %v291 = vunpack.c.l.b16 %v84
    %v292 = vunpack.c.l.b16 %v85
    %v293 = vunpack.c.l.b16 %v86
    %v294 = vunpack.c.l.b16 %v87
    %v295 = vunpack.c.l.b16 %v88
    %v296 = vunpack.c.l.b16 %v89
    %v297 = vunpack.c.l.b16 %v90
    %v298 = vunpack.c.l.b16 %v91
    %v299 = vunpack.c.l.b16 %v92
    %v300 = vunpack.c.l.b16 %v93
    %v301 = vunpack.c.l.b16 %v94
    %v302 = vunpack.c.l.b16 %v95
    %v303 = vunpack.c.l.b16 %v96
    %v304 = vunpack.c.l.b16 %v97
    %v305 = vunpack.c.l.b16 %v98
    %v306 = vunpack.c.l.b16 %v99
    %v307 = vunpack.c.l.b16 %v100
    %v308 = vunpack.c.l.b16 %v101
    %v309 = vunpack.c.l.b16 %v102
    %v310 = vunpack.c.l.b16 %v103
    %v311 = vunpack.c.l.b16 %v104
    %v312 = vunpack.c.l.b16 %v105
    %v313 = vunpack.c.l.b16 %v106
    %v314 = vunpack.c.l.b16 %v107
    %v315 = vunpack.c.l.b16 %v108
    %v316 = vunpack.c.l.b16 %v109
    %v317 = vunpack.c.l.b16 %v110
    %v318 = vunpack.c.l.b16 %v111
    %v319 = vunpack.c.l.b16 %v112
    %v320 = vunpack.c.l.b16 %v113
    %v321 = vunpack.c.l.b16 %v114
    %v322 = vunpack.c.l.b16 %v115
    %v323 = vunpack.c.l.b16 %v116
    %v324 = vunpack.c.l.b16 %v117
    %v325 = vunpack.c.l.b16 %v118
    %v326 = vunpack.c.l.b16 %v119
    %v327 = vunpack.c.l.b16 %v120
    %v328 = vunpack.c.l.b16 %v121
    %v329 = vunpack.c.l.b16 %v122
    %v330 = vunpack.c.l.b16 %v123
    %v331 = vunpack.c.l.b16 %v124
    %v332 = vunpack.c.l.b16 %v125
    %v333 = vunpack.c.l.b16 %v126
    %v334 = vunpack.c.l.b16 %v127
    %v335 = vunpack.c.l.b16 %v128
    %v336 = vunpack.c.l.b16 %v129
    %v337 = vunpack.c.l.b16 %v130
    %v338 = vunpack.c.l.b16 %v131
    %v339 = vunpack.c.l.b16 %v132
    %v340 = vunpack.c.l.b16 %v133
    %v341 = vunpack.c.l.b16 %v134
    %v342 = vunpack.c.l.b16 %v135
    %v343 = vunpack.c.l.b16 %v136
    %v344 = vunpack.c.l.b16 %v137
    %v345 = vunpack.c.l.b16 %v138
    %v346 = vunpack.c.l.b16 %v139
    %v347 = vunpack.c.l.b16 %v140
    %v348 = vunpack.c.l.b16 %v141
    %v349 = vunpack.c.l.b16 %v142
    %v350 = vunpack.c.l.b16 %v143
    %v351 = vunpack.c.l.b16 %v144
    %v352 = vunpack.c.l.b16 %v145
    %v353 = vunpack.c.l.b16 %v146
    %v354 = vunpack.c.l.b16 %v147
    %v355 = vunpack.c.l.b16 %v148
    %v356 = vunpack.c.l.b16 %v149
    %v357 = vunpack.c.l.b16 %v150
    %v358 = vunpack.c.l.b16 %v151
    %v359 = vunpack.c.l.b16 %v152
    %v360 = vunpack.c.l.b16 %v153
    %v361 = vunpack.c.l.b16 %v154
    %v362 = vunpack.c.l.b16 %v155
    %v363 = vunpack.c.l.b16 %v156
    %v364 = vunpack.c.l.b16 %v157
    %v365 = vunpack.c.l.b16 %v158
    %v366 = vunpack.c.l.b16 %v159
    %v367 = vunpack.c.l.b16 %v160
    %v368 = vunpack.c.l.b16 %v161
    %v369 = vunpack.c.l.b16 %v162
    %v370 = vunpack.c.l.b16 %v163
    %v371 = vunpack.c.l.b16 %v164
    %v372 = vunpack.c.l.b16 %v165
    %v373 = vunpack.c.l.b16 %v166
    %v374 = vunpack.c.l.b16 %v167
    %v375 = vunpack.c.l.b16 %v168
    %v376 = vunpack.c.l.b16 %v169
    %v377 = vpack.c.b16 %v280, %v279
    %v378 = vpack.c.b16 %v282, %v281
    %v379 = vpack.c.b16 %v284, %v283
    %v380 = vpack.c.b16 %v286, %v285
    %v381 = vpack.c.b16 %v288, %v287
    %v382 = vpack.c.b16 %v290, %v289
    %v383 = vpack.c.b16 %v292, %v291
    %v384 = vpack.c.b16 %v294, %v293
    %v385 = vpack.c.b16 %v296, %v295
    %v386 = vpack.c.b16 %v298, %v297
    %v387 = vpack.c.b16 %v300, %v299
    %v388 = vpack.c.b16 %v302, %v301
    %v389 = vpack.c.b16 %v304, %v303
    %v390 = vpack.c.b16 %v306, %v305
    %v391 = vpack.c.b16 %v308, %v307
    %v392 = vpack.c.b16 %v310, %v309
    %v393 = vpack.c.b16 %v312, %v311
    %v394 = vpack.c.b16 %v314, %v313
    %v395 = vpack.c.b16 %v316, %v315
    %v396 = vpack.c.b16 %v318, %v317
    %v397 = vpack.c.b16 %v320, %v319
    %v398 = vpack.c.b16 %v322, %v321
    %v399 = vpack.c.b16 %v324, %v323
    %v400 = vpack.c.b16 %v326, %v325
    %v401 = vpack.c.b16 %v328, %v327
    %v402 = vpack.c.b16 %v330, %v329
    %v403 = vpack.c.b16 %v332, %v331
    %v404 = vpack.c.b16 %v334, %v333
    %v405 = vpack.c.b16 %v336, %v335
    %v406 = vpack.c.b16 %v338, %v337
    %v407 = vpack.c.b16 %v340, %v339
    %v408 = vpack.c.b16 %v342, %v341
    %v409 = vpack.c.b16 %v344, %v343
    %v410 = vpack.c.b16 %v346, %v345
    %v411 = vpack.c.b16 %v348, %v347
    %v412 = vpack.c.b16 %v350, %v349
    %v413 = vpack.c.b16 %v352, %v351
    %v414 = vpack.c.b16 %v354, %v353
    %v415 = vpack.c.b16 %v356, %v355
    %v416 = vpack.c.b16 %v358, %v357
    %v417 = vpack.c.b16 %v360, %v359
    %v418 = vpack.c.b16 %v362, %v361
    %v419 = vpack.c.b16 %v364, %v363
    %v420 = vpack.c.b16 %v366, %v365
    %v421 = vpack.c.b16 %v368, %v367
    %v422 = vpack.c.b16 %v370, %v369
    %v423 = vpack.c.b16 %v372, %v371
    %v424 = vpack.c.b16 %v374, %v373
    %v425 = vpack.c.b16 %v376, %v375
    %vm475 = vcmask 130048
    %v477 = vsel %vm475, %v177, 0
    %479 = vmatpush.bf16.msra.mxu0 %v384
    %480 = vmatpush.bf16.msra.mxu0 %v383
    %481 = vmatpush.bf16.msra.mxu0 %v382
    %482 = vmatpush.bf16.msra.mxu0 %v381
    %483 = vmatpush.bf16.msra.mxu0 %v380
    %484 = vmatpush.bf16.msra.mxu0 %v379
    %485 = vmatpush.bf16.msra.mxu0 %v378
    %486 = vmatpush.bf16.msra.mxu0 %v377
    %487 = vmatmul.bf16.gmra.mxu0 %v171
    %v488 = vpop.f32.mrf.mxu0
    %v489 = vadd.f32 %v179, %v488
    %v490 = vpop.f32.mrf.mxu0
    %v491 = vadd.f32 %v179, %v490
    %492 = vdwg.mxu0
    %493 = vmatpush.bf16.msra.mxu0 %v392
    %494 = vmatpush.bf16.msra.mxu0 %v391
    %495 = vmatpush.bf16.msra.mxu0 %v390
    %496 = vmatpush.bf16.msra.mxu0 %v389
    %497 = vmatpush.bf16.msra.mxu0 %v388
    %498 = vmatpush.bf16.msra.mxu0 %v387
    %499 = vmatpush.bf16.msra.mxu0 %v386
    %500 = vmatpush.bf16.msra.mxu0 %v385
    %501 = vmatmul.bf16.gmra.mxu0 %v172
    %v502 = vpop.f32.mrf.mxu0
    %v503 = vadd.f32 %v489, %v502
    %v504 = vpop.f32.mrf.mxu0
    %v505 = vadd.f32 %v491, %v504
    %506 = vdwg.mxu0
    %507 = vmatpush.bf16.msra.mxu0 %v400
    %508 = vmatpush.bf16.msra.mxu0 %v399
    %509 = vmatpush.bf16.msra.mxu0 %v398
    %510 = vmatpush.bf16.msra.mxu0 %v397
    %511 = vmatpush.bf16.msra.mxu0 %v396
    %512 = vmatpush.bf16.msra.mxu0 %v395
    %513 = vmatpush.bf16.msra.mxu0 %v394
    %514 = vmatpush.bf16.msra.mxu0 %v393
    %515 = vmatmul.bf16.gmra.mxu0 %v173
    %v516 = vpop.f32.mrf.mxu0
    %v517 = vadd.f32 %v503, %v516
    %v518 = vpop.f32.mrf.mxu0
    %v519 = vadd.f32 %v505, %v518
    %520 = vdwg.mxu0
    %521 = vmatpush.bf16.msra.mxu0 %v408
    %522 = vmatpush.bf16.msra.mxu0 %v407
    %523 = vmatpush.bf16.msra.mxu0 %v406
    %524 = vmatpush.bf16.msra.mxu0 %v405
    %525 = vmatpush.bf16.msra.mxu0 %v404
    %526 = vmatpush.bf16.msra.mxu0 %v403
    %527 = vmatpush.bf16.msra.mxu0 %v402
    %528 = vmatpush.bf16.msra.mxu0 %v401
    %529 = vmatmul.bf16.gmra.mxu0 %v174
    %v530 = vpop.f32.mrf.mxu0
    %v531 = vadd.f32 %v517, %v530
    %v532 = vpop.f32.mrf.mxu0
    %v533 = vadd.f32 %v519, %v532
    %534 = vdwg.mxu0
    %535 = vmatpush.bf16.msra.mxu0 %v416
    %536 = vmatpush.bf16.msra.mxu0 %v415
    %537 = vmatpush.bf16.msra.mxu0 %v414
    %538 = vmatpush.bf16.msra.mxu0 %v413
    %539 = vmatpush.bf16.msra.mxu0 %v412
    %540 = vmatpush.bf16.msra.mxu0 %v411
    %541 = vmatpush.bf16.msra.mxu0 %v410
    %542 = vmatpush.bf16.msra.mxu0 %v409
    %543 = vmatmul.bf16.gmra.mxu0 %v175
    %v544 = vpop.f32.mrf.mxu0
    %v545 = vadd.f32 %v531, %v544
    %v546 = vpop.f32.mrf.mxu0
    %v547 = vadd.f32 %v533, %v546
    %548 = vdwg.mxu0
    %549 = vmatpush.bf16.msra.mxu0 %v424
    %550 = vmatpush.bf16.msra.mxu0 %v423
    %551 = vmatpush.bf16.msra.mxu0 %v422
    %552 = vmatpush.bf16.msra.mxu0 %v421
    %553 = vmatpush.bf16.msra.mxu0 %v420
    %554 = vmatpush.bf16.msra.mxu0 %v419
    %555 = vmatpush.bf16.msra.mxu0 %v418
    %556 = vmatpush.bf16.msra.mxu0 %v417
    %557 = vmatmul.bf16.gmra.mxu0 %v176
    %v558 = vpop.f32.mrf.mxu0
    %v559 = vadd.f32 %v545, %v558
    %v560 = vpop.f32.mrf.mxu0
    %v561 = vadd.f32 %v547, %v560
    %562 = vdwg.mxu0
    %563 = vmatpush.bf16.msra.mxu0 0
    %564 = vmatpush.bf16.msra.mxu0 0
    %565 = vmatpush.bf16.msra.mxu0 0
    %566 = vmatpush.bf16.msra.mxu0 0
    %567 = vmatpush.bf16.msra.mxu0 0
    %568 = vmatpush.bf16.msra.mxu0 0
    %569 = vmatpush.bf16.msra.mxu0 0
    %570 = vmatpush.bf16.msra.mxu0 %v425
    %571 = vmatmul.bf16.gmra.mxu0 %v477
    %v572 = vpop.f32.mrf.mxu0
    %v573 = vadd.f32 %v559, %v572
    %v574 = vpop.f32.mrf.mxu0
    %v575 = vadd.f32 %v561, %v574
    %576 = vdwg.mxu0
    %v577 = vmax.f32 %v573, 0.0
    %v578 = vmax.f32 %v575, 0.0
    %v579 = vld [vmem:[%s3] sm:$0xf]
    %v580 = vld [vmem:[%s3 + $0x4] sm:$0xf]
    %v581 = vld [vmem:[%s3 + $0x8] sm:$0xf]
    %v582 = vld [vmem:[%s3 + $0xc] sm:$0xf]
    %v583 = vld [vmem:[%s3 + $0x10] sm:$0xf]
    %v584 = vld [vmem:[%s3 + $0x14] sm:$0xf]
    %v585 = vld [vmem:[%s3 + $0x18] sm:$0xf]
    %v586 = vld [vmem:[%s3 + $0x1c] sm:$0xf]
    %v587 = vld [vmem:[%s3 + $0x20] sm:$0xf]
    %v588 = vld [vmem:[%s3 + $0x24] sm:$0xf]
    %v589 = vld [vmem:[%s3 + $0x28] sm:$0xf]
    %v590 = vld [vmem:[%s3 + $0x2c] sm:$0xf]
    %v591 = vld [vmem:[%s3 + $0x30] sm:$0xf]
    %v592 = vld [vmem:[%s3 + $0x34] sm:$0xf]
    %v593 = vld [vmem:[%s3 + $0x38] sm:$0xf]
    %v594 = vld [vmem:[%s3 + $0x3c] sm:$0xf]
    %v595 = vld [vmem:[%s4] sm:$0x1]
    %v596 = vpack.c.bf16 %v578, %v577
    %v598 = vperm.slane %v595, 0
    %v616 = vunpack.c.l.b16 %v579
    %v617 = vunpack.c.l.b16 %v580
    %v618 = vunpack.c.l.b16 %v581
    %v619 = vunpack.c.l.b16 %v582
    %v620 = vunpack.c.l.b16 %v583
    %v621 = vunpack.c.l.b16 %v584
    %v622 = vunpack.c.l.b16 %v585
    %v623 = vunpack.c.l.b16 %v586
    %v624 = vunpack.c.l.b16 %v587
    %v625 = vunpack.c.l.b16 %v588
    %v626 = vunpack.c.l.b16 %v589
    %v627 = vunpack.c.l.b16 %v590
    %v628 = vunpack.c.l.b16 %v591
    %v629 = vunpack.c.l.b16 %v592
    %v630 = vunpack.c.l.b16 %v593
    %v631 = vunpack.c.l.b16 %v594
    %v632 = vpack.c.b16 %v617, %v616
    %v633 = vpack.c.b16 %v619, %v618
    %v634 = vpack.c.b16 %v621, %v620
    %v635 = vpack.c.b16 %v623, %v622
    %v636 = vpack.c.b16 %v625, %v624
    %v637 = vpack.c.b16 %v627, %v626
    %v638 = vpack.c.b16 %v629, %v628
    %v639 = vpack.c.b16 %v631, %v630
    %648 = vmatpush.bf16.msra.mxu0 %v639
    %649 = vmatpush.bf16.msra.mxu0 %v638
    %650 = vmatpush.bf16.msra.mxu0 %v637
    %651 = vmatpush.bf16.msra.mxu0 %v636
    %652 = vmatpush.bf16.msra.mxu0 %v635
    %653 = vmatpush.bf16.msra.mxu0 %v634
    %654 = vmatpush.bf16.msra.mxu0 %v633
    %655 = vmatpush.bf16.msra.mxu0 %v632
    %656 = vmatmul.bf16.gmra.mxu0 %v596
    %v657 = vpop.f32.mrf.mxu0
    %v658 = vadd.f32 %v598, %v657
    %v659 = vpop.f32.mrf.mxu0
    %v660 = vadd.f32 %v598, %v659
    %661 = vdwg.mxu0
    %v662 = vmax.f32 %v658, 0.0
    %v663 = vmax.f32 %v660, 0.0
    %v664 = vld [vmem:[%s5] sm:$0xf]
    %v665 = vld [vmem:[%s5 + $0x4] sm:$0xf]
    %v666 = vld [vmem:[%s5 + $0x8] sm:$0xf]
    %v667 = vld [vmem:[%s5 + $0xc] sm:$0xf]
    %v668 = vld [vmem:[%s5 + $0x10] sm:$0xf]
    %v669 = vld [vmem:[%s5 + $0x14] sm:$0xf]
    %v670 = vld [vmem:[%s5 + $0x18] sm:$0xf]
    %v671 = vld [vmem:[%s5 + $0x1c] sm:$0xf]
    %v672 = vld [vmem:[%s6] sm:$0x1]
    %v673 = vpack.c.bf16 %v663, %v662
    %v675 = vperm.slane %v672, 0
    %v685 = vunpack.c.l.b16 %v664
    %v686 = vunpack.c.l.b16 %v665
    %v687 = vunpack.c.l.b16 %v666
    %v688 = vunpack.c.l.b16 %v667
    %v689 = vunpack.c.l.b16 %v668
    %v690 = vunpack.c.l.b16 %v669
    %v691 = vunpack.c.l.b16 %v670
    %v692 = vunpack.c.l.b16 %v671
    %v693 = vpack.c.b16 %v686, %v685
    %v694 = vpack.c.b16 %v688, %v687
    %v695 = vpack.c.b16 %v690, %v689
    %v696 = vpack.c.b16 %v692, %v691
    %vm701 = vcmask 523264
    %v703 = vsel %vm701, %v673, 0
    %705 = vmatpush.bf16.msra.mxu0 0
    %706 = vmatpush.bf16.msra.mxu0 0
    %707 = vmatpush.bf16.msra.mxu0 0
    %708 = vmatpush.bf16.msra.mxu0 0
    %709 = vmatpush.bf16.msra.mxu0 %v696
    %710 = vmatpush.bf16.msra.mxu0 %v695
    %711 = vmatpush.bf16.msra.mxu0 %v694
    %712 = vmatpush.bf16.msra.mxu0 %v693
    %713 = vmatmul.bf16.gmra.mxu0 %v703
    %v714 = vpop.f32.mrf.mxu0
    %v715 = vadd.f32 %v675, %v714
    %v716 = vpop.f32.mrf.mxu0
    %v717 = vadd.f32 %v675, %v716
    %718 = vdwg.mxu0
    %v719 = vmax.f32 %v715, 0.0
    %v720 = vmax.f32 %v717, 0.0
    %v721 = vld [vmem:[%s7] sm:$0xf]
    %v722 = vld [vmem:[%s7 + $0x4] sm:$0x3]
    %v723 = vld [vmem:[%s8] sm:$0x1]
    %v724 = vpack.c.bf16 %v720, %v719
    %v726 = vperm.slane %v723, 0
    %v730 = vunpack.c.l.b16 %v721
    %v731 = vunpack.c.l.b16 %v722
    %v732 = vpack.c.b16 %v731, %v730
    %vm733 = vcmask 97280
    %v735 = vsel %vm733, %v724, 0
    %vm737 = vcmask 1045504
    %v739 = vsel %vm737, %v732, 0
    %741 = vmatpush.bf16.msra.mxu0 0
    %742 = vmatpush.bf16.msra.mxu0 0
    %743 = vmatpush.bf16.msra.mxu0 0
    %744 = vmatpush.bf16.msra.mxu0 0
    %745 = vmatpush.bf16.msra.mxu0 0
    %746 = vmatpush.bf16.msra.mxu0 0
    %747 = vmatpush.bf16.msra.mxu0 0
    %748 = vmatpush.bf16.msra.mxu0 %v739
    %749 = vmatmul.bf16.gmra.mxu0 %v735
    %v750 = vpop.f32.mrf.mxu0
    %v751 = vadd.f32 %v726, %v750
    %v752 = vpop.f32.mrf.mxu0
    %v753 = vadd.f32 %v726, %v752
    %754 = vdwg.mxu0
    %v755 = vld [vmem:[%s9] sm:$0x3]
    %v756 = vld [vmem:[%s10] sm:$0x1]
    %v757 = vpack.c.bf16 %v753, %v751
    %v759 = vperm.slane %v756, 0
    %vm761 = vcmask 23552
    %v763 = vsel %vm761, %v757, 0
    %vm765 = vcmask 1040384
    %vm766 = vcmask 1041408
    %v767 = vsel %vm765, 4294967295, 65535
    %v768 = vsel %vm766, %v767, 0
    %v770 = vand.u32 %v755, %v768
    %772 = vmatpush.bf16.msra.mxu0 0
    %773 = vmatpush.bf16.msra.mxu0 0
    %774 = vmatpush.bf16.msra.mxu0 0
    %775 = vmatpush.bf16.msra.mxu0 0
    %776 = vmatpush.bf16.msra.mxu0 0
    %777 = vmatpush.bf16.msra.mxu0 0
    %778 = vmatpush.bf16.msra.mxu0 0
    %779 = vmatpush.bf16.msra.mxu0 %v770
    %780 = vmatmul.bf16.gmra.mxu0 %v763
    %v781 = vpop.f32.mrf.mxu0
    %v782 = vadd.f32 %v759, %v781
    %v783 = vpop.f32.mrf.mxu0
    %v784 = vadd.f32 %v759, %v783
    %785 = vdwg.mxu0
    %v786 = vmax.f32 %v782, 0.0
    %v787 = vmax.f32 %v784, 0.0
    %v788 = vld [vmem:[%s11] sm:$0xf]
    %v789 = vld [vmem:[%s11 + $0x4] sm:$0x3]
    %v790 = vld [vmem:[%s12] sm:$0x1]
    %v791 = vpack.c.bf16 %v787, %v786
    %v793 = vperm.slane %v790, 0
    %v797 = vunpack.c.l.b16 %v788
    %v798 = vunpack.c.l.b16 %v789
    %v799 = vpack.c.b16 %v798, %v797
    %v801 = vsel %vm733, %v791, 0
    %v804 = vsel %vm737, %v799, 0
    %806 = vmatpush.bf16.msra.mxu0 0
    %807 = vmatpush.bf16.msra.mxu0 0
    %808 = vmatpush.bf16.msra.mxu0 0
    %809 = vmatpush.bf16.msra.mxu0 0
    %810 = vmatpush.bf16.msra.mxu0 0
    %811 = vmatpush.bf16.msra.mxu0 0
    %812 = vmatpush.bf16.msra.mxu0 0
    %813 = vmatpush.bf16.msra.mxu0 %v804
    %814 = vmatmul.bf16.gmra.mxu0 %v801
    %v815 = vpop.f32.mrf.mxu0
    %v816 = vadd.f32 %v793, %v815
    %v817 = vpop.f32.mrf.mxu0
    %v818 = vadd.f32 %v793, %v817
    %819 = vdwg.mxu0
    %v820 = vmax.f32 %v816, 0.0
    %v821 = vmax.f32 %v818, 0.0
    %v822 = vld [vmem:[%s13] sm:$0xf]
    %v823 = vld [vmem:[%s13 + $0x4] sm:$0xf]
    %v824 = vld [vmem:[%s13 + $0x8] sm:$0xf]
    %v825 = vld [vmem:[%s13 + $0xc] sm:$0xf]
    %v826 = vld [vmem:[%s13 + $0x10] sm:$0xf]
    %v827 = vld [vmem:[%s13 + $0x14] sm:$0xf]
    %v828 = vld [vmem:[%s13 + $0x18] sm:$0xf]
    %v829 = vld [vmem:[%s13 + $0x1c] sm:$0xf]
    %v830 = vld [vmem:[%s14] sm:$0x1]
    %v831 = vpack.c.bf16 %v821, %v820
    %v833 = vperm.slane %v830, 0
    %v843 = vunpack.c.l.b16 %v822
    %v844 = vunpack.c.l.b16 %v823
    %v845 = vunpack.c.l.b16 %v824
    %v846 = vunpack.c.l.b16 %v825
    %v847 = vunpack.c.l.b16 %v826
    %v848 = vunpack.c.l.b16 %v827
    %v849 = vunpack.c.l.b16 %v828
    %v850 = vunpack.c.l.b16 %v829
    %v851 = vpack.c.b16 %v844, %v843
    %v852 = vpack.c.b16 %v846, %v845
    %v853 = vpack.c.b16 %v848, %v847
    %v854 = vpack.c.b16 %v850, %v849
    %v860 = vsel %vm701, %v831, 0
    %862 = vmatpush.bf16.msra.mxu0 0
    %863 = vmatpush.bf16.msra.mxu0 0
    %864 = vmatpush.bf16.msra.mxu0 0
    %865 = vmatpush.bf16.msra.mxu0 0
    %866 = vmatpush.bf16.msra.mxu0 %v854
    %867 = vmatpush.bf16.msra.mxu0 %v853
    %868 = vmatpush.bf16.msra.mxu0 %v852
    %869 = vmatpush.bf16.msra.mxu0 %v851
    %870 = vmatmul.bf16.gmra.mxu0 %v860
    %v871 = vpop.f32.mrf.mxu0
    %v872 = vadd.f32 %v833, %v871
    %v873 = vpop.f32.mrf.mxu0
    %v874 = vadd.f32 %v833, %v873
    %875 = vdwg.mxu0
    %v876 = vmax.f32 %v872, 0.0
    %v877 = vmax.f32 %v874, 0.0
    %v878 = vld [vmem:[%s15] sm:$0xff]
    %v879 = vld [vmem:[%s15 + $0x8] sm:$0xff]
    %v880 = vld [vmem:[%s15 + $0x10] sm:$0xff]
    %v881 = vld [vmem:[%s15 + $0x18] sm:$0xf]
    %v882 = vld [vmem:[%s15 + $0x1c] sm:$0xff]
    %v883 = vld [vmem:[%s15 + $0x24] sm:$0xff]
    %v884 = vld [vmem:[%s15 + $0x2c] sm:$0xff]
    %v885 = vld [vmem:[%s15 + $0x34] sm:$0xf]
    %v886 = vld [vmem:[%s15 + $0x38] sm:$0xff]
    %v887 = vld [vmem:[%s15 + $0x40] sm:$0xff]
    %v888 = vld [vmem:[%s15 + $0x48] sm:$0xff]
    %v889 = vld [vmem:[%s15 + $0x50] sm:$0xf]
    %v890 = vld [vmem:[%s15 + $0x54] sm:$0xff]
    %v891 = vld [vmem:[%s15 + $0x5c] sm:$0xff]
    %v892 = vld [vmem:[%s15 + $0x64] sm:$0xff]
    %v893 = vld [vmem:[%s15 + $0x6c] sm:$0xf]
    %v894 = vld [vmem:[%s15 + $0x70] sm:$0xff]
    %v895 = vld [vmem:[%s15 + $0x78] sm:$0xff]
    %v896 = vld [vmem:[%s15 + $0x80] sm:$0xff]
    %v897 = vld [vmem:[%s15 + $0x88] sm:$0xf]
    %v898 = vld [vmem:[%s15 + $0x8c] sm:$0xff]
    %v899 = vld [vmem:[%s15 + $0x94] sm:$0xff]
    %v900 = vld [vmem:[%s15 + $0x9c] sm:$0xff]
    %v901 = vld [vmem:[%s15 + $0xa4] sm:$0xf]
    %v902 = vld [vmem:[%s15 + $0xa8] sm:$0xff]
    %v903 = vld [vmem:[%s15 + $0xb0] sm:$0xff]
    %v904 = vld [vmem:[%s15 + $0xb8] sm:$0xff]
    %v905 = vld [vmem:[%s15 + $0xc0] sm:$0xf]
    %v906 = vld [vmem:[%s15 + $0xc4] sm:$0xff]
    %v907 = vld [vmem:[%s15 + $0xcc] sm:$0xff]
    %v908 = vld [vmem:[%s15 + $0xd4] sm:$0xff]
    %v909 = vld [vmem:[%s15 + $0xdc] sm:$0xf]
    %v910 = vld [vmem:[%s15 + $0xe0] sm:$0xff]
    %v911 = vld [vmem:[%s15 + $0xe8] sm:$0xff]
    %v912 = vld [vmem:[%s15 + $0xf0] sm:$0xff]
    %v913 = vld [vmem:[%s15 + $0xf8] sm:$0xf]
    %v914 = vld [vmem:[%s15 + $0xfc] sm:$0xff]
    %v915 = vld [vmem:[%s15 + $0x104] sm:$0xff]
    %v916 = vld [vmem:[%s15 + $0x10c] sm:$0xff]
    %v917 = vld [vmem:[%s15 + $0x114] sm:$0xf]
    %v918 = vld [vmem:[%s15 + $0x118] sm:$0xff]
    %v919 = vld [vmem:[%s15 + $0x120] sm:$0xff]
    %v920 = vld [vmem:[%s15 + $0x128] sm:$0xff]
    %v921 = vld [vmem:[%s15 + $0x130] sm:$0xf]
    %v922 = vld [vmem:[%s15 + $0x134] sm:$0xff]
    %v923 = vld [vmem:[%s15 + $0x13c] sm:$0xff]
    %v924 = vld [vmem:[%s15 + $0x144] sm:$0xff]
    %v925 = vld [vmem:[%s15 + $0x14c] sm:$0xf]
    %v926 = vld [vmem:[%s15 + $0x150] sm:$0xff]
    %v927 = vld [vmem:[%s15 + $0x158] sm:$0xff]
    %v928 = vld [vmem:[%s15 + $0x160] sm:$0xff]
    %v929 = vld [vmem:[%s15 + $0x168] sm:$0xf]
    %v930 = vld [vmem:[%s15 + $0x16c] sm:$0xff]
    %v931 = vld [vmem:[%s15 + $0x174] sm:$0xff]
    %v932 = vld [vmem:[%s15 + $0x17c] sm:$0xff]
    %v933 = vld [vmem:[%s15 + $0x184] sm:$0xf]
    %v934 = vld [vmem:[%s15 + $0x188] sm:$0xff]
    %v935 = vld [vmem:[%s15 + $0x190] sm:$0xff]
    %v936 = vld [vmem:[%s15 + $0x198] sm:$0xff]
    %v937 = vld [vmem:[%s15 + $0x1a0] sm:$0xf]
    %v938 = vld [vmem:[%s15 + $0x1a4] sm:$0xff]
    %v939 = vld [vmem:[%s15 + $0x1ac] sm:$0xff]
    %v940 = vld [vmem:[%s15 + $0x1b4] sm:$0xff]
    %v941 = vld [vmem:[%s15 + $0x1bc] sm:$0xf]
    %v942 = vld [vmem:[%s16] sm:$0x7f]
    %v943 = vpack.c.bf16 %v877, %v876
    %v945 = vperm.slane %v942, 0
    %v946 = vperm.slane %v942, 1
    %v947 = vperm.slane %v942, 2
    %v948 = vperm.slane %v942, 3
    %v949 = vperm.slane %v942, 4
    %v950 = vperm.slane %v942, 5
    %v951 = vperm.slane %v942, 6
    %v1023 = vunpack.c.l.b16 %v878
    %v1024 = vunpack.c.h.b16 %v878
    %v1025 = vunpack.c.l.b16 %v879
    %v1026 = vunpack.c.h.b16 %v879
    %v1027 = vunpack.c.l.b16 %v880
    %v1028 = vunpack.c.h.b16 %v880
    %v1029 = vunpack.c.l.b16 %v881
    %v1030 = vunpack.c.l.b16 %v882
    %v1031 = vunpack.c.h.b16 %v882
    %v1032 = vunpack.c.l.b16 %v883
    %v1033 = vunpack.c.h.b16 %v883
    %v1034 = vunpack.c.l.b16 %v884
    %v1035 = vunpack.c.h.b16 %v884
    %v1036 = vunpack.c.l.b16 %v885
    %v1037 = vunpack.c.l.b16 %v886
    %v1038 = vunpack.c.h.b16 %v886
    %v1039 = vunpack.c.l.b16 %v887
    %v1040 = vunpack.c.h.b16 %v887
    %v1041 = vunpack.c.l.b16 %v888
    %v1042 = vunpack.c.h.b16 %v888
    %v1043 = vunpack.c.l.b16 %v889
    %v1044 = vunpack.c.l.b16 %v890
    %v1045 = vunpack.c.h.b16 %v890
    %v1046 = vunpack.c.l.b16 %v891
    %v1047 = vunpack.c.h.b16 %v891
    %v1048 = vunpack.c.l.b16 %v892
    %v1049 = vunpack.c.h.b16 %v892
    %v1050 = vunpack.c.l.b16 %v893
    %v1051 = vunpack.c.l.b16 %v894
    %v1052 = vunpack.c.h.b16 %v894
    %v1053 = vunpack.c.l.b16 %v895
    %v1054 = vunpack.c.h.b16 %v895
    %v1055 = vunpack.c.l.b16 %v896
    %v1056 = vunpack.c.h.b16 %v896
    %v1057 = vunpack.c.l.b16 %v897
    %v1058 = vunpack.c.l.b16 %v898
    %v1059 = vunpack.c.h.b16 %v898
    %v1060 = vunpack.c.l.b16 %v899
    %v1061 = vunpack.c.h.b16 %v899
    %v1062 = vunpack.c.l.b16 %v900
    %v1063 = vunpack.c.h.b16 %v900
    %v1064 = vunpack.c.l.b16 %v901
    %v1065 = vunpack.c.l.b16 %v902
    %v1066 = vunpack.c.h.b16 %v902
    %v1067 = vunpack.c.l.b16 %v903
    %v1068 = vunpack.c.h.b16 %v903
    %v1069 = vunpack.c.l.b16 %v904
    %v1070 = vunpack.c.h.b16 %v904
    %v1071 = vunpack.c.l.b16 %v905
    %v1072 = vunpack.c.l.b16 %v906
    %v1073 = vunpack.c.h.b16 %v906
    %v1074 = vunpack.c.l.b16 %v907
    %v1075 = vunpack.c.h.b16 %v907
    %v1076 = vunpack.c.l.b16 %v908
    %v1077 = vunpack.c.h.b16 %v908
    %v1078 = vunpack.c.l.b16 %v909
    %v1079 = vunpack.c.l.b16 %v910
    %v1080 = vunpack.c.h.b16 %v910
    %v1081 = vunpack.c.l.b16 %v911
    %v1082 = vunpack.c.h.b16 %v911
    %v1083 = vunpack.c.l.b16 %v912
    %v1084 = vunpack.c.h.b16 %v912
    %v1085 = vunpack.c.l.b16 %v913
    %v1086 = vunpack.c.l.b16 %v914
    %v1087 = vunpack.c.h.b16 %v914
    %v1088 = vunpack.c.l.b16 %v915
    %v1089 = vunpack.c.h.b16 %v915
    %v1090 = vunpack.c.l.b16 %v916
    %v1091 = vunpack.c.h.b16 %v916
    %v1092 = vunpack.c.l.b16 %v917
    %v1093 = vunpack.c.l.b16 %v918
    %v1094 = vunpack.c.h.b16 %v918
    %v1095 = vunpack.c.l.b16 %v919
    %v1096 = vunpack.c.h.b16 %v919
    %v1097 = vunpack.c.l.b16 %v920
    %v1098 = vunpack.c.h.b16 %v920
    %v1099 = vunpack.c.l.b16 %v921
    %v1100 = vunpack.c.l.b16 %v922
    %v1101 = vunpack.c.h.b16 %v922
    %v1102 = vunpack.c.l.b16 %v923
    %v1103 = vunpack.c.h.b16 %v923
    %v1104 = vunpack.c.l.b16 %v924
    %v1105 = vunpack.c.h.b16 %v924
    %v1106 = vunpack.c.l.b16 %v925
    %v1107 = vunpack.c.l.b16 %v926
    %v1108 = vunpack.c.h.b16 %v926
    %v1109 = vunpack.c.l.b16 %v927
    %v1110 = vunpack.c.h.b16 %v927
    %v1111 = vunpack.c.l.b16 %v928
    %v1112 = vunpack.c.h.b16 %v928
    %v1113 = vunpack.c.l.b16 %v929
    %v1114 = vunpack.c.l.b16 %v930
    %v1115 = vunpack.c.h.b16 %v930
    %v1116 = vunpack.c.l.b16 %v931
    %v1117 = vunpack.c.h.b16 %v931
    %v1118 = vunpack.c.l.b16 %v932
    %v1119 = vunpack.c.h.b16 %v932
    %v1120 = vunpack.c.l.b16 %v933
    %v1121 = vunpack.c.l.b16 %v934
    %v1122 = vunpack.c.h.b16 %v934
    %v1123 = vunpack.c.l.b16 %v935
    %v1124 = vunpack.c.h.b16 %v935
    %v1125 = vunpack.c.l.b16 %v936
    %v1126 = vunpack.c.h.b16 %v936
    %v1127 = vunpack.c.l.b16 %v937
    %v1128 = vunpack.c.l.b16 %v938
    %v1129 = vunpack.c.h.b16 %v938
    %v1130 = vunpack.c.l.b16 %v939
    %v1131 = vunpack.c.h.b16 %v939
    %v1132 = vunpack.c.l.b16 %v940
    %v1133 = vunpack.c.h.b16 %v940
    %v1134 = vunpack.c.l.b16 %v941
    %v1135 = vpack.c.b16 %v1030, %v1023
    %v1136 = vpack.c.b16 %v1031, %v1024
    %v1137 = vpack.c.b16 %v1032, %v1025
    %v1138 = vpack.c.b16 %v1033, %v1026
    %v1139 = vpack.c.b16 %v1034, %v1027
    %v1140 = vpack.c.b16 %v1035, %v1028
    %v1141 = vpack.c.b16 %v1036, %v1029
    %v1142 = vpack.c.b16 %v1044, %v1037
    %v1143 = vpack.c.b16 %v1045, %v1038
    %v1144 = vpack.c.b16 %v1046, %v1039
    %v1145 = vpack.c.b16 %v1047, %v1040
    %v1146 = vpack.c.b16 %v1048, %v1041
    %v1147 = vpack.c.b16 %v1049, %v1042
    %v1148 = vpack.c.b16 %v1050, %v1043
    %v1149 = vpack.c.b16 %v1058, %v1051
    %v1150 = vpack.c.b16 %v1059, %v1052
    %v1151 = vpack.c.b16 %v1060, %v1053
    %v1152 = vpack.c.b16 %v1061, %v1054
    %v1153 = vpack.c.b16 %v1062, %v1055
    %v1154 = vpack.c.b16 %v1063, %v1056
    %v1155 = vpack.c.b16 %v1064, %v1057
    %v1156 = vpack.c.b16 %v1072, %v1065
    %v1157 = vpack.c.b16 %v1073, %v1066
    %v1158 = vpack.c.b16 %v1074, %v1067
    %v1159 = vpack.c.b16 %v1075, %v1068
    %v1160 = vpack.c.b16 %v1076, %v1069
    %v1161 = vpack.c.b16 %v1077, %v1070
    %v1162 = vpack.c.b16 %v1078, %v1071
    %v1163 = vpack.c.b16 %v1086, %v1079
    %v1164 = vpack.c.b16 %v1087, %v1080
    %v1165 = vpack.c.b16 %v1088, %v1081
    %v1166 = vpack.c.b16 %v1089, %v1082
    %v1167 = vpack.c.b16 %v1090, %v1083
    %v1168 = vpack.c.b16 %v1091, %v1084
    %v1169 = vpack.c.b16 %v1092, %v1085
    %v1170 = vpack.c.b16 %v1100, %v1093
    %v1171 = vpack.c.b16 %v1101, %v1094
    %v1172 = vpack.c.b16 %v1102, %v1095
    %v1173 = vpack.c.b16 %v1103, %v1096
    %v1174 = vpack.c.b16 %v1104, %v1097
    %v1175 = vpack.c.b16 %v1105, %v1098
    %v1176 = vpack.c.b16 %v1106, %v1099
    %v1177 = vpack.c.b16 %v1114, %v1107
    %v1178 = vpack.c.b16 %v1115, %v1108
    %v1179 = vpack.c.b16 %v1116, %v1109
    %v1180 = vpack.c.b16 %v1117, %v1110
    %v1181 = vpack.c.b16 %v1118, %v1111
    %v1182 = vpack.c.b16 %v1119, %v1112
    %v1183 = vpack.c.b16 %v1120, %v1113
    %v1184 = vpack.c.b16 %v1128, %v1121
    %v1185 = vpack.c.b16 %v1129, %v1122
    %v1186 = vpack.c.b16 %v1130, %v1123
    %v1187 = vpack.c.b16 %v1131, %v1124
    %v1188 = vpack.c.b16 %v1132, %v1125
    %v1189 = vpack.c.b16 %v1133, %v1126
    %v1190 = vpack.c.b16 %v1134, %v1127
    %1247 = vmatpush.bf16.msra.mxu0 %v1184
    %1248 = vmatpush.bf16.msra.mxu0 %v1177
    %1249 = vmatpush.bf16.msra.mxu0 %v1170
    %1250 = vmatpush.bf16.msra.mxu0 %v1163
    %1251 = vmatpush.bf16.msra.mxu0 %v1156
    %1252 = vmatpush.bf16.msra.mxu0 %v1149
    %1253 = vmatpush.bf16.msra.mxu0 %v1142
    %1254 = vmatpush.bf16.msra.mxu0 %v1135
    %1255 = vmatmul.bf16.gmra.mxu0 %v943
    %v1256 = vpop.f32.mrf.mxu0
    %v1257 = vadd.f32 %v945, %v1256
    %v1258 = vpop.f32.mrf.mxu0
    %v1259 = vadd.f32 %v945, %v1258
    %1260 = vdwg.mxu0
    %1261 = vmatpush.bf16.msra.mxu0 %v1185
    %1262 = vmatpush.bf16.msra.mxu0 %v1178
    %1263 = vmatpush.bf16.msra.mxu0 %v1171
    %1264 = vmatpush.bf16.msra.mxu0 %v1164
    %1265 = vmatpush.bf16.msra.mxu0 %v1157
    %1266 = vmatpush.bf16.msra.mxu0 %v1150
    %1267 = vmatpush.bf16.msra.mxu0 %v1143
    %1268 = vmatpush.bf16.msra.mxu0 %v1136
    %1269 = vmatmul.bf16.gmra.mxu0 %v943
    %v1270 = vpop.f32.mrf.mxu0
    %v1271 = vadd.f32 %v946, %v1270
    %v1272 = vpop.f32.mrf.mxu0
    %v1273 = vadd.f32 %v946, %v1272
    %1274 = vdwg.mxu0
    %1275 = vmatpush.bf16.msra.mxu0 %v1186
    %1276 = vmatpush.bf16.msra.mxu0 %v1179
    %1277 = vmatpush.bf16.msra.mxu0 %v1172
    %1278 = vmatpush.bf16.msra.mxu0 %v1165
    %1279 = vmatpush.bf16.msra.mxu0 %v1158
    %1280 = vmatpush.bf16.msra.mxu0 %v1151
    %1281 = vmatpush.bf16.msra.mxu0 %v1144
    %1282 = vmatpush.bf16.msra.mxu0 %v1137
    %1283 = vmatmul.bf16.gmra.mxu0 %v943
    %v1284 = vpop.f32.mrf.mxu0
    %v1285 = vadd.f32 %v947, %v1284
    %v1286 = vpop.f32.mrf.mxu0
    %v1287 = vadd.f32 %v947, %v1286
    %1288 = vdwg.mxu0
    %1289 = vmatpush.bf16.msra.mxu0 %v1187
    %1290 = vmatpush.bf16.msra.mxu0 %v1180
    %1291 = vmatpush.bf16.msra.mxu0 %v1173
    %1292 = vmatpush.bf16.msra.mxu0 %v1166
    %1293 = vmatpush.bf16.msra.mxu0 %v1159
    %1294 = vmatpush.bf16.msra.mxu0 %v1152
    %1295 = vmatpush.bf16.msra.mxu0 %v1145
    %1296 = vmatpush.bf16.msra.mxu0 %v1138
    %1297 = vmatmul.bf16.gmra.mxu0 %v943
    %v1298 = vpop.f32.mrf.mxu0
    %v1299 = vadd.f32 %v948, %v1298
    %v1300 = vpop.f32.mrf.mxu0
    %v1301 = vadd.f32 %v948, %v1300
    %1302 = vdwg.mxu0
    %1303 = vmatpush.bf16.msra.mxu0 %v1188
    %1304 = vmatpush.bf16.msra.mxu0 %v1181
    %1305 = vmatpush.bf16.msra.mxu0 %v1174
    %1306 = vmatpush.bf16.msra.mxu0 %v1167
    %1307 = vmatpush.bf16.msra.mxu0 %v1160
    %1308 = vmatpush.bf16.msra.mxu0 %v1153
    %1309 = vmatpush.bf16.msra.mxu0 %v1146
    %1310 = vmatpush.bf16.msra.mxu0 %v1139
    %1311 = vmatmul.bf16.gmra.mxu0 %v943
    %v1312 = vpop.f32.mrf.mxu0
    %v1313 = vadd.f32 %v949, %v1312
    %v1314 = vpop.f32.mrf.mxu0
    %v1315 = vadd.f32 %v949, %v1314
    %1316 = vdwg.mxu0
    %1317 = vmatpush.bf16.msra.mxu0 %v1189
    %1318 = vmatpush.bf16.msra.mxu0 %v1182
    %1319 = vmatpush.bf16.msra.mxu0 %v1175
    %1320 = vmatpush.bf16.msra.mxu0 %v1168
    %1321 = vmatpush.bf16.msra.mxu0 %v1161
    %1322 = vmatpush.bf16.msra.mxu0 %v1154
    %1323 = vmatpush.bf16.msra.mxu0 %v1147
    %1324 = vmatpush.bf16.msra.mxu0 %v1140
    %1325 = vmatmul.bf16.gmra.mxu0 %v943
    %v1326 = vpop.f32.mrf.mxu0
    %v1327 = vadd.f32 %v950, %v1326
    %v1328 = vpop.f32.mrf.mxu0
    %v1329 = vadd.f32 %v950, %v1328
    %1330 = vdwg.mxu0
    %1331 = vmatpush.bf16.msra.mxu0 %v1190
    %1332 = vmatpush.bf16.msra.mxu0 %v1183
    %1333 = vmatpush.bf16.msra.mxu0 %v1176
    %1334 = vmatpush.bf16.msra.mxu0 %v1169
    %1335 = vmatpush.bf16.msra.mxu0 %v1162
    %1336 = vmatpush.bf16.msra.mxu0 %v1155
    %1337 = vmatpush.bf16.msra.mxu0 %v1148
    %1338 = vmatpush.bf16.msra.mxu0 %v1141
    %1339 = vmatmul.bf16.gmra.mxu0 %v943
    %v1340 = vpop.f32.mrf.mxu0
    %v1341 = vadd.f32 %v951, %v1340
    %v1342 = vpop.f32.mrf.mxu0
    %v1343 = vadd.f32 %v951, %v1342
    %1344 = vdwg.mxu0
    %v1345 = vtanh.pop %v1257
    %v1346 = vtanh.pop %v1271
    %v1347 = vtanh.pop %v1285
    %v1348 = vtanh.pop %v1299
    %v1349 = vtanh.pop %v1313
    %v1350 = vtanh.pop %v1327
    %v1351 = vtanh.pop %v1341
    %v1352 = vtanh.pop %v1259
    %v1353 = vtanh.pop %v1273
    %v1354 = vtanh.pop %v1287
    %v1355 = vtanh.pop %v1301
    %v1356 = vtanh.pop %v1315
    %v1357 = vtanh.pop %v1329
    %v1358 = vtanh.pop %v1343
    %1359 = vst [vmem:[#allocation2] sm:$0xff] %v1345
    %1360 = vst [vmem:[#allocation2 + $0x8] sm:$0xff] %v1346
    %1361 = vst [vmem:[#allocation2 + $0x10] sm:$0xff] %v1347
    %1362 = vst [vmem:[#allocation2 + $0x18] sm:$0xff] %v1348
    %1363 = vst [vmem:[#allocation2 + $0x20] sm:$0xff] %v1349
    %1364 = vst [vmem:[#allocation2 + $0x28] sm:$0xff] %v1350
    %1365 = vst.msk [vmem:[#allocation2 + $0x30] sm:$0xff] %vm475, %v1351
    %1366 = vst [vmem:[#allocation2 + $0x38] sm:$0xff] %v1352
    %1367 = vst [vmem:[#allocation2 + $0x40] sm:$0xff] %v1353
    %1368 = vst [vmem:[#allocation2 + $0x48] sm:$0xff] %v1354
    %1369 = vst [vmem:[#allocation2 + $0x50] sm:$0xff] %v1355
    %1370 = vst [vmem:[#allocation2 + $0x58] sm:$0xff] %v1356
    %1371 = vst [vmem:[#allocation2 + $0x60] sm:$0xff] %v1357
    %1372 = vst.msk [vmem:[#allocation2 + $0x68] sm:$0xff] %vm475, %v1358
    // Predicated region
    $region70: #{autoencoder_forward.1} parent=1 // pred_check
      _
    $region71: #{autoencoder_forward.1} parent=1 // pred_check_branch
      %1374 = sbr.rel (0) target = $region73
    $region72: #{autoencoder_forward.1} parent=1 // pred_region
      %1376 = vsyncadd [#allocation3], 0
      %s1377 = sshll.u32 [#allocation2], 4
      %s1378 = int_to_ptr.vmem [resolvable:$true] %s1377
      %s1379 = sshll.u32 %s17, 4
      %s1380 = int_to_ptr.hbm [resolvable:$true] %s1379
      %1385 = dma.vmem_to_hbm [thread:$0]  %s1378, 1792, %s1380, [#allocation3], 896, 896, 56
    $region73: #{autoencoder_forward.1} parent=1 // pred_fallthru
      _
    // Predicated region
    $region74: #{autoencoder_forward.1} parent=1 // pred_check
      _
    $region75: #{autoencoder_forward.1} parent=1 // pred_check_branch
      %1387 = sbr.rel (0) target = $region77
    $region76: #{autoencoder_forward.1} parent=1 // pred_region
      %1389 = dma.done [#allocation3], 1792
    $region77: #{autoencoder_forward.1} parent=1 // pred_fallthru
      _
    %1390 = vsyncpa [#allocation3], 1

</llo_original>
